<compile_context>
chip_gen: v7x
topology: tpu7x:2x2x1
jax: 0.10.0
libtpu: 0.0.40
codegen_flags: <defaults>
</compile_context>

<pallas_src>
import jax
import jax.numpy as jnp
from jax.experimental import pallas as pl
from jax.experimental.pallas import tpu as pltpu


HIDDEN = 96       # matches nn.Linear(inputs, 96)
_SUBLANE = 16     # bf16 sublane packing (also a multiple of the f32 8)


def _round_up(n, m):
    return ((n + m - 1) // m) * m


def fc_kernel(x_ref, w1_ref, b1_ref, w2_ref, b2_ref, o_ref):
    # Cast x to the weight compute dtype in-kernel (VPU; free vs. the HBM
    # round-trip a wrapper-side cast would cost).  f32 weights -> no-op cast.
    x = x_ref[...].astype(w1_ref.dtype)
    # layer1: (TB, K) @ (K, H) with f32 accumulation on the MXU
    h = jnp.dot(x, w1_ref[...], preferred_element_type=jnp.float32)
    h = jnp.maximum(h + b1_ref[...], 0.0)          # bias + ReLU in f32 (VPU)
    # layer2: (TB, H) @ (H, N), again f32 accumulation
    out = jnp.dot(h.astype(w2_ref.dtype), w2_ref[...],
                  preferred_element_type=jnp.float32)
    o_ref[...] = (out + b2_ref[...]).astype(o_ref.dtype)


def pack_fc_params(w1, b1, w2, b2, *, compute_dtype=jnp.bfloat16):
    """One-time packing of the FC parameters for fc_forward.

    Weights are cast to the matmul compute dtype (bf16 fast path, or f32 for
    exact semantics); biases stay f32 as (1, features) rows.  Do this once and
    reuse across calls — not per forward.
    """
    inputs, hidden = w1.shape
    hidden2, outputs = w2.shape
    assert hidden == hidden2
    w1p = w1.astype(compute_dtype)
    w2p = w2.astype(compute_dtype)
    b1p = jnp.reshape(b1, (1, hidden)).astype(jnp.float32)
    b2p = jnp.reshape(b2, (1, outputs)).astype(jnp.float32)
    return w1p, b1p, w2p, b2p


def fc_forward(x, w1p, b1p, w2p, b2p, *, block_batch=1024):
    """y = relu(x @ w1 + b1) @ w2 + b2

    x:   (B, inputs)        — any float dtype (bf16 input halves read bytes)
    w1p: (inputs, hidden)   — pre-packed via pack_fc_params (transposed vs.
    w2p: (hidden, outputs)    PyTorch nn.Linear.weight)
    b1p: (1, hidden) f32
    b2p: (1, outputs) f32
    """
    B, inputs = x.shape
    in_dim, hidden = w1p.shape
    hidden2, outputs = w2p.shape
    assert in_dim == inputs and hidden2 == hidden

    # Batch tile: multiple of 16 (bf16 sublanes).  Cap at ceil(B/2) rounded up
    # so the grid has >= 2 steps whenever B > 16 — lets the "parallel" batch
    # axis shard across both v7x TensorCores.  VMEM is nowhere near a limit
    # (double-buffered x tiles are a few MiB even at TB=1024, inputs=784).
    half = _round_up(pl.cdiv(B, 2), _SUBLANE)
    TB = max(_SUBLANE, min(block_batch, half))
    grid = (pl.cdiv(B, TB),)   # ragged last tile: OOB reads/writes are handled

    flops = 2 * B * (inputs * hidden + hidden * outputs)
    bytes_accessed = (x.size * x.dtype.itemsize
                      + w1p.size * w1p.dtype.itemsize
                      + b1p.size * b1p.dtype.itemsize
                      + w2p.size * w2p.dtype.itemsize
                      + b2p.size * b2p.dtype.itemsize
                      + B * outputs * 4)

    out = pl.pallas_call(
        fc_kernel,
        out_shape=jax.ShapeDtypeStruct((B, outputs), jnp.float32),
        grid=grid,
        in_specs=[
            # x: tiled over batch; full (unpadded) feature dim on the lanes.
            pl.BlockSpec((TB, inputs), lambda i: (i, 0)),
            pl.BlockSpec((inputs, hidden), lambda i: (0, 0)),   # W1 resident
            pl.BlockSpec((1, hidden), lambda i: (0, 0)),        # b1 resident
            pl.BlockSpec((hidden, outputs), lambda i: (0, 0)),  # W2 resident
            pl.BlockSpec((1, outputs), lambda i: (0, 0)),       # b2 resident
        ],
        # Narrow (real-width) output tile: masked store, but ~12.8x fewer HBM
        # write bytes than a 128-lane-padded f32 tile when outputs << 128.
        out_specs=pl.BlockSpec((TB, outputs), lambda i: (i, 0)),
        compiler_params=pltpu.CompilerParams(
            dimension_semantics=("parallel",)),
        cost_estimate=pl.CostEstimate(
            flops=flops, transcendentals=0, bytes_accessed=bytes_accessed),
    )(x, w1p, b1p, w2p, b2p)

    return out.astype(x.dtype)


def init_fc_params(key, inputs, outputs, hidden=HIDDEN, dtype=jnp.float32):
    """Deterministic init matching PyTorch nn.Linear's default
    U(-1/sqrt(fan_in), 1/sqrt(fan_in)) scheme (weights stored transposed)."""
    k1, k2, k3, k4 = jax.random.split(key, 4)
    bound1 = 1.0 / (inputs ** 0.5)
    bound2 = 1.0 / (hidden ** 0.5)
    w1 = jax.random.uniform(k1, (inputs, hidden), dtype, -bound1, bound1)
    b1 = jax.random.uniform(k2, (1, hidden), dtype, -bound1, bound1)
    w2 = jax.random.uniform(k3, (hidden, outputs), dtype, -bound2, bound2)
    b2 = jax.random.uniform(k4, (1, outputs), dtype, -bound2, bound2)
    return w1, b1, w2, b2


if __name__ == "__main__":
    key = jax.random.PRNGKey(0)
    kx, kp = jax.random.split(key)

    # Small MLP consistent with FC(inputs, outputs).
    B, INPUTS, OUTPUTS = 160, 64, 10
    x = jax.random.normal(kx, (B, INPUTS), jnp.float32)
    w1, b1, w2, b2 = init_fc_params(kp, INPUTS, OUTPUTS)

    # Pure-JAX reference of the same math.
    ref = jnp.maximum(x @ w1 + b1, 0.0) @ w2 + b2

    # 1) Exact-semantics check: f32 weights, default block_batch -> TB=80,
    #    grid=2 (the v7x-friendly even split), tight tolerance.
    params_f32 = pack_fc_params(w1, b1, w2, b2, compute_dtype=jnp.float32)
    y32 = jax.block_until_ready(fc_forward(x, *params_f32))
    assert y32.shape == (B, OUTPUTS)
    assert jnp.allclose(y32, ref, atol=1e-5, rtol=1e-5)

    # 2) Fast path: bf16 weights + in-kernel bf16 cast of x, f32 MXU
    #    accumulation; block_batch=64 -> grid=3 with a ragged last tile.
    params_bf16 = pack_fc_params(w1, b1, w2, b2, compute_dtype=jnp.bfloat16)
    y = jax.block_until_ready(fc_forward(x, *params_bf16, block_batch=64))
    assert y.shape == (B, OUTPUTS)
    assert jnp.allclose(y, ref, atol=2e-2, rtol=2e-2)

    print("KERNEL_OK")
</pallas_src>

<mosaic_0001>
module attributes {stable_mosaic.version = 11 : i64} {
  func.func @fc_kernel(%arg0: i32, %arg1: memref<80x64xf32, #tpu.memory_space<vmem>>, %arg2: memref<64x96xf32, #tpu.memory_space<vmem>>, %arg3: memref<1x96xf32, #tpu.memory_space<vmem>>, %arg4: memref<96x10xf32, #tpu.memory_space<vmem>>, %arg5: memref<1x10xf32, #tpu.memory_space<vmem>>, %arg6: memref<80x10xf32, #tpu.memory_space<vmem>>) attributes {dimension_semantics = [#tpu.dimension_semantics<parallel>], iteration_bounds = array<i64: 2>, scalar_prefetch = 0 : i64, scratch_operands = 0 : i64, tpu.core_type = #tpu.core_type<tc>, window_params = [{transform_indices = @transform_0, window_bounds = array<i64: 80, 64>}, {pipeline_mode = #tpu.pipeline_mode<synchronous>, transform_indices = @transform_1, window_bounds = array<i64: 64, 96>}, {pipeline_mode = #tpu.pipeline_mode<synchronous>, transform_indices = @transform_2, window_bounds = array<i64: 1, 96>}, {pipeline_mode = #tpu.pipeline_mode<synchronous>, transform_indices = @transform_3, window_bounds = array<i64: 96, 10>}, {pipeline_mode = #tpu.pipeline_mode<synchronous>, transform_indices = @transform_4, window_bounds = array<i64: 1, 10>}, {transform_indices = @transform_5, window_bounds = array<i64: 80, 10>}]} {
    %c0 = arith.constant 0 : index
    %c0_0 = arith.constant 0 : index
    %0 = vector.load %arg1[%c0, %c0_0] : memref<80x64xf32, #tpu.memory_space<vmem>>, vector<80x64xf32>
    %c0_1 = arith.constant 0 : index
    %c0_2 = arith.constant 0 : index
    %1 = vector.load %arg2[%c0_1, %c0_2] : memref<64x96xf32, #tpu.memory_space<vmem>>, vector<64x96xf32>
    %cst = arith.constant dense<0.000000e+00> : vector<80x96xf32>
    %2 = tpu.matmul %0, %1, %cst {dimension_numbers = #tpu.dot_dimension_numbers<[1], [0], [0], [1], [0, 0, 1, 1], [], []>} : vector<80x64xf32>, vector<64x96xf32>, vector<80x96xf32> -> vector<80x96xf32>
    %c0_3 = arith.constant 0 : index
    %c0_4 = arith.constant 0 : index
    %3 = vector.load %arg3[%c0_3, %c0_4] : memref<1x96xf32, #tpu.memory_space<vmem>>, vector<1x96xf32>
    %4 = vector.broadcast %3 : vector<1x96xf32> to vector<80x96xf32>
    %5 = arith.addf %2, %4 : vector<80x96xf32>
    %cst_5 = arith.constant 0.000000e+00 : f32
    %6 = vector.broadcast %cst_5 : f32 to vector<80x96xf32>
    %7 = arith.maximumf %5, %6 : vector<80x96xf32>
    %c0_6 = arith.constant 0 : index
    %c0_7 = arith.constant 0 : index
    %8 = vector.load %arg4[%c0_6, %c0_7] : memref<96x10xf32, #tpu.memory_space<vmem>>, vector<96x10xf32>
    %cst_8 = arith.constant dense<0.000000e+00> : vector<80x10xf32>
    %9 = tpu.matmul %7, %8, %cst_8 {dimension_numbers = #tpu.dot_dimension_numbers<[1], [0], [0], [1], [0, 0, 1, 1], [], []>} : vector<80x96xf32>, vector<96x10xf32>, vector<80x10xf32> -> vector<80x10xf32>
    %c0_9 = arith.constant 0 : index
    %c0_10 = arith.constant 0 : index
    %10 = vector.load %arg5[%c0_9, %c0_10] : memref<1x10xf32, #tpu.memory_space<vmem>>, vector<1x10xf32>
    %11 = vector.broadcast %10 : vector<1x10xf32> to vector<80x10xf32>
    %12 = arith.addf %9, %11 : vector<80x10xf32>
    %c0_11 = arith.constant 0 : index
    %c0_12 = arith.constant 0 : index
    %13 = vector.load %arg6[%c0_11, %c0_12] : memref<80x10xf32, #tpu.memory_space<vmem>>, vector<80x10xf32>
    tpu.vector_store %arg6[%c0_11, %c0_12], %12 {strides = array<i32>} : memref<80x10xf32, #tpu.memory_space<vmem>>, vector<80x10xf32>,
    return
  }
  func.func @transform_0(%arg0: i32) -> (i32, i32) {
    %c0_i32 = arith.constant 0 : i32
    %c0_i32_0 = arith.constant 0 : i32
    return %arg0, %c0_i32 : i32, i32
  }
  func.func @transform_1(%arg0: i32) -> (i32, i32) {
    %c0_i32 = arith.constant 0 : i32
    %c0_i32_0 = arith.constant 0 : i32
    %c0_i32_1 = arith.constant 0 : i32
    return %c0_i32, %c0_i32_0 : i32, i32
  }
  func.func @transform_2(%arg0: i32) -> (i32, i32) {
    %c0_i32 = arith.constant 0 : i32
    %c0_i32_0 = arith.constant 0 : i32
    %c0_i32_1 = arith.constant 0 : i32
    return %c0_i32, %c0_i32_0 : i32, i32
  }
  func.func @transform_3(%arg0: i32) -> (i32, i32) {
    %c0_i32 = arith.constant 0 : i32
    %c0_i32_0 = arith.constant 0 : i32
    %c0_i32_1 = arith.constant 0 : i32
    return %c0_i32, %c0_i32_0 : i32, i32
  }
  func.func @transform_4(%arg0: i32) -> (i32, i32) {
    %c0_i32 = arith.constant 0 : i32
    %c0_i32_0 = arith.constant 0 : i32
    %c0_i32_1 = arith.constant 0 : i32
    return %c0_i32, %c0_i32_0 : i32, i32
  }
  func.func @transform_5(%arg0: i32) -> (i32, i32) {
    %c0_i32 = arith.constant 0 : i32
    %c0_i32_0 = arith.constant 0 : i32
    return %arg0, %c0_i32 : i32, i32
  }
}

</mosaic_0001>

<llo_original>
// kernel: tpu_custom_call.1
$region0: #{tpu_custom_call.1}
  #allocation0 [shape = 'u32[]', space=smem, size = 0x4, offset = 0x4, fixed_abs, tag = 'smem constant byte address 0x4 - core index']
  #allocation1 [shape = 'u32[144,128]{1,0:T(1,128)}', space=vmem, size = 0x12000, scoped, tag = 'internal scratch']
  %s0 = inlined_call_operand.vmem [shape: f32[160,64], index: 0, kind: input, shape index: {}]
  %s1 = inlined_call_operand.vmem [shape: f32[64,96], index: 1, kind: input, shape index: {}]
  %s2 = inlined_call_operand.vmem [shape: f32[1,96], index: 2, kind: input, shape index: {}]
  %s3 = inlined_call_operand.vmem [shape: f32[96,10], index: 3, kind: input, shape index: {}]
  %s4 = inlined_call_operand.vmem [shape: f32[1,10], index: 4, kind: input, shape index: {}]
  %s5 = inlined_call_operand.vmem [shape: f32[160,10], index: 5, kind: output, shape index: {}]
  %s6 = sld [smem:[#allocation0]]
  $region53: #{tpu_custom_call.1} parent=0
    _
  %s8 = ssub.s32 1, %s6
  %s9 = scalar_select 0, %s8, %s6
  loop: start=0, step=1, limit=4
  $region2: #{tpu_custom_call.1} parent=0 // loop_pre_header
    _
  $region3: #{tpu_custom_call.1} parent=0 // loop_header
    %s11 = sphi 0, %s15
    %p12 = scmp.ge.s32.totalorder %s11, 4
    %s21 = sphi 0, %s23
    %s24 = sphi 0, %s21
    %s25 = sphi 0, %s24
    %s41 = sphi 0, %s25
    %s45 = sphi 0, %s45
    %s47 = sphi 0, %s45
    %s48 = sphi 0, %s47
    %s62 = sphi 0, %s48
    %s66 = sphi 0, %s66
    %s68 = sphi 0, %s66
    %s69 = sphi 0, %s68
    %s83 = sphi 0, %s69
    %s87 = sphi 0, %s87
    %s89 = sphi 0, %s87
    %s90 = sphi 0, %s89
    %s104 = sphi 0, %s90
    %s108 = sphi 0, %s108
    %s110 = sphi 0, %s108
    %s111 = sphi 0, %s110
    %s125 = sphi 0, %s111
    %s131 = sphi 0, %s133
    %s134 = sphi 0, %s131
    %s135 = sphi 0, %s134
    %s151 = sphi 0, %s135
  $region4: #{tpu_custom_call.1} parent=0 // loop_header_branch
    %14 = sbr.rel (%p12) target = $region8
  $region5: #{tpu_custom_call.1} parent=0 // loop_body
    %s16 = ssub.s32 %s11, 1
    %s17 = ssub.s32 %s11, 2
    %s18 = sadd.s32 %s11, 1
    %s19 = ssub.s32 %s11, %s18
    %p20 = scmp.eq.s32.totalorder %s19, 0
    %s22 = sadd.s32 %s21, 1
    %s23 = scalar_select %p20, %s21, %s22
    %p26 = pneg %p20
    %p27 = scmp.eq.s32.totalorder %s11, 1
    %p28 = por %p26, %p27
    %p29 = scmp.ne.s32.totalorder %s21, %s24
    %p30 = scmp.eq.s32.totalorder %s11, 0
    %p31 = por %p29, %p30
    %p32 = scmp.ne.s32.totalorder %s21, %s24
    %p33 = scmp.eq.s32.totalorder %s16, 1
    %p34 = por %p32, %p33
    %p35 = scmp.ne.s32.totalorder %s24, %s25
    %p36 = scmp.eq.s32.totalorder %s16, 0
    %p37 = por %p35, %p36
    %p38 = scmp.ne.s32.totalorder %s24, %s25
    %p39 = scmp.eq.s32.totalorder %s17, 1
    %p40 = por %p38, %p39
    %p42 = scmp.ne.s32.totalorder %s25, %s41
    %p43 = scmp.eq.s32.totalorder %s17, 0
    %p44 = por %p42, %p43
    %s46 = sadd.s32 %s45, 1
    %p49 = scmp.eq.s32.totalorder %s11, 1
    %p50 = scmp.ne.s32.totalorder %s45, %s47
    %p51 = scmp.eq.s32.totalorder %s11, 0
    %p52 = por %p50, %p51
    %p53 = scmp.ne.s32.totalorder %s45, %s47
    %p54 = scmp.eq.s32.totalorder %s16, 1
    %p55 = por %p53, %p54
    %p56 = scmp.ne.s32.totalorder %s47, %s48
    %p57 = scmp.eq.s32.totalorder %s16, 0
    %p58 = por %p56, %p57
    %p59 = scmp.ne.s32.totalorder %s47, %s48
    %p60 = scmp.eq.s32.totalorder %s17, 1
    %p61 = por %p59, %p60
    %p63 = scmp.ne.s32.totalorder %s48, %s62
    %p64 = scmp.eq.s32.totalorder %s17, 0
    %p65 = por %p63, %p64
    %s67 = sadd.s32 %s66, 1
    %p70 = scmp.eq.s32.totalorder %s11, 1
    %p71 = scmp.ne.s32.totalorder %s66, %s68
    %p72 = scmp.eq.s32.totalorder %s11, 0
    %p73 = por %p71, %p72
    %p74 = scmp.ne.s32.totalorder %s66, %s68
    %p75 = scmp.eq.s32.totalorder %s16, 1
    %p76 = por %p74, %p75
    %p77 = scmp.ne.s32.totalorder %s68, %s69
    %p78 = scmp.eq.s32.totalorder %s16, 0
    %p79 = por %p77, %p78
    %p80 = scmp.ne.s32.totalorder %s68, %s69
    %p81 = scmp.eq.s32.totalorder %s17, 1
    %p82 = por %p80, %p81
    %p84 = scmp.ne.s32.totalorder %s69, %s83
    %p85 = scmp.eq.s32.totalorder %s17, 0
    %p86 = por %p84, %p85
    %s88 = sadd.s32 %s87, 1
    %p91 = scmp.eq.s32.totalorder %s11, 1
    %p92 = scmp.ne.s32.totalorder %s87, %s89
    %p93 = scmp.eq.s32.totalorder %s11, 0
    %p94 = por %p92, %p93
    %p95 = scmp.ne.s32.totalorder %s87, %s89
    %p96 = scmp.eq.s32.totalorder %s16, 1
    %p97 = por %p95, %p96
    %p98 = scmp.ne.s32.totalorder %s89, %s90
    %p99 = scmp.eq.s32.totalorder %s16, 0
    %p100 = por %p98, %p99
    %p101 = scmp.ne.s32.totalorder %s89, %s90
    %p102 = scmp.eq.s32.totalorder %s17, 1
    %p103 = por %p101, %p102
    %p105 = scmp.ne.s32.totalorder %s90, %s104
    %p106 = scmp.eq.s32.totalorder %s17, 0
    %p107 = por %p105, %p106
    %s109 = sadd.s32 %s108, 1
    %p112 = scmp.eq.s32.totalorder %s11, 1
    %p113 = scmp.ne.s32.totalorder %s108, %s110
    %p114 = scmp.eq.s32.totalorder %s11, 0
    %p115 = por %p113, %p114
    %p116 = scmp.ne.s32.totalorder %s108, %s110
    %p117 = scmp.eq.s32.totalorder %s16, 1
    %p118 = por %p116, %p117
    %p119 = scmp.ne.s32.totalorder %s110, %s111
    %p120 = scmp.eq.s32.totalorder %s16, 0
    %p121 = por %p119, %p120
    %p122 = scmp.ne.s32.totalorder %s110, %s111
    %p123 = scmp.eq.s32.totalorder %s17, 1
    %p124 = por %p122, %p123
    %p126 = scmp.ne.s32.totalorder %s111, %s125
    %p127 = scmp.eq.s32.totalorder %s17, 0
    %p128 = por %p126, %p127
    %s129 = ssub.s32 %s11, %s18
    %p130 = scmp.eq.s32.totalorder %s129, 0
    %s132 = sadd.s32 %s131, 1
    %s133 = scalar_select %p130, %s131, %s132
    %p136 = pneg %p130
    %p137 = scmp.eq.s32.totalorder %s11, 1
    %p138 = por %p136, %p137
    %p139 = scmp.ne.s32.totalorder %s131, %s134
    %p140 = scmp.eq.s32.totalorder %s11, 0
    %p141 = por %p139, %p140
    %p142 = scmp.ne.s32.totalorder %s131, %s134
    %p143 = scmp.eq.s32.totalorder %s16, 1
    %p144 = por %p142, %p143
    %p145 = scmp.ne.s32.totalorder %s134, %s135
    %p146 = scmp.eq.s32.totalorder %s16, 0
    %p147 = por %p145, %p146
    %p148 = scmp.ne.s32.totalorder %s134, %s135
    %p149 = scmp.eq.s32.totalorder %s17, 1
    %p150 = por %p148, %p149
    %p152 = scmp.ne.s32.totalorder %s135, %s151
    %p153 = scmp.eq.s32.totalorder %s17, 0
    %p154 = por %p152, %p153
    %p155 = scmp.le.s32.totalorder 1, %s11
    %p156 = scmp.lt.s32.totalorder %s11, 3
    %p157 = pnand %p155, %p156
    %p158 = pneg %p157
    // Predicated region
    $region9: #{tpu_custom_call.1} parent=5 // pred_check
      _
    $region10: #{tpu_custom_call.1} parent=5 // pred_check_branch
      %160 = sbr.rel (%p157) target = $region12
    $region11: #{tpu_custom_call.1} parent=5 // pred_region
      %s161 = ssub.s32 %s11, 1
      // Predicated region
      $region13: #{tpu_custom_call.1} parent=11 // pred_check
        %p162 = pneg %p58
      $region14: #{tpu_custom_call.1} parent=11 // pred_check_branch
        %164 = sbr.rel (%p162) target = $region16
      $region15: #{tpu_custom_call.1} parent=11 // pred_region
        _
      $region16: #{tpu_custom_call.1} parent=11 // pred_fallthru
        _
      // Predicated region
      $region17: #{tpu_custom_call.1} parent=11 // pred_check
        %p165 = pneg %p79
      $region18: #{tpu_custom_call.1} parent=11 // pred_check_branch
        %167 = sbr.rel (%p165) target = $region20
      $region19: #{tpu_custom_call.1} parent=11 // pred_region
        _
      $region20: #{tpu_custom_call.1} parent=11 // pred_fallthru
        _
      // Predicated region
      $region21: #{tpu_custom_call.1} parent=11 // pred_check
        %p168 = pneg %p100
      $region22: #{tpu_custom_call.1} parent=11 // pred_check_branch
        %170 = sbr.rel (%p168) target = $region24
      $region23: #{tpu_custom_call.1} parent=11 // pred_region
        _
      $region24: #{tpu_custom_call.1} parent=11 // pred_fallthru
        _
      // Predicated region
      $region25: #{tpu_custom_call.1} parent=11 // pred_check
        %p171 = pneg %p121
      $region26: #{tpu_custom_call.1} parent=11 // pred_check_branch
        %173 = sbr.rel (%p171) target = $region28
      $region27: #{tpu_custom_call.1} parent=11 // pred_region
        _
      $region28: #{tpu_custom_call.1} parent=11 // pred_fallthru
        _
    $region12: #{tpu_custom_call.1} parent=5 // pred_fallthru
      _
    %p174 = scmp.lt.s32.totalorder %s11, 2
    // Predicated region
    $region29: #{tpu_custom_call.1} parent=5 // pred_check
      %p175 = pneg %p174
    $region30: #{tpu_custom_call.1} parent=5 // pred_check_branch
      %177 = sbr.rel (%p175) target = $region32
    $region31: #{tpu_custom_call.1} parent=5 // pred_region
      // Predicated region
      $region33: #{tpu_custom_call.1} parent=31 // pred_check
        %p178 = pneg %p31
      $region34: #{tpu_custom_call.1} parent=31 // pred_check_branch
        %180 = sbr.rel (%p178) target = $region36
      $region35: #{tpu_custom_call.1} parent=31 // pred_region
        %s181 = smul.u32 10, %s11
        %p182 = scmp.lt.s32.totalorder %s181, 19
        %s183 = scalar_select %p182, %s181, 19
        %s184 = smul.addr %s183, 8
        %s185 = scalar_lea.vmem %s0, %s184
        %s186 = smul.u32 10, %s11
      $region36: #{tpu_custom_call.1} parent=31 // pred_fallthru
        _
    $region32: #{tpu_custom_call.1} parent=5 // pred_fallthru
      _
    %p187 = scmp.le.s32.totalorder 1, %s11
    %p188 = scmp.lt.s32.totalorder %s11, 3
    %p189 = pnand %p187, %p188
    %p190 = pneg %p189
    // Predicated region
    $region37: #{tpu_custom_call.1} parent=5 // pred_check
      _
    $region38: #{tpu_custom_call.1} parent=5 // pred_check_branch
      %192 = sbr.rel (%p189) target = $region40
    $region39: #{tpu_custom_call.1} parent=5 // pred_region
      %s193 = ssub.s32 %s11, 1
      %s194 = smul.u32 10, %s16
      %p195 = scmp.lt.s32.totalorder %s194, 19
      %s196 = scalar_select %p195, %s194, 19
      %s197 = smul.addr %s196, 8
      %s198 = scalar_lea.vmem %s0, %s197
      %p199 = pneg %p37
      %p200 = pneg %p34
      %p201 = pneg %p58
      %p202 = pneg %p55
      %p203 = pneg %p79
      %p204 = pneg %p76
      %p205 = pneg %p100
      %p206 = pneg %p97
      %p207 = pneg %p121
      %p208 = pneg %p118
      %p209 = pneg %p147
      %p210 = pneg %p144
      %s211 = smul.u32 10, %s16
      %p212 = scmp.lt.s32.totalorder %s211, 19
      %s213 = scalar_select %p212, %s211, 19
      %s214 = smul.addr %s213, 8
      %s215 = scalar_lea.vmem %s5, %s214
      %s216 = smul.u32 10, %s16
      %p217 = scmp.lt.s32.totalorder %s216, 19
      %s218 = scalar_select %p217, %s216, 19
      %s219 = smul.addr %s218, 8
      %s220 = scalar_lea.vmem %s0, %s219
      %s221 = smul.u32 10, %s16
      %s222 = smul.u32 10, %s16
      %p223 = scmp.lt.s32.totalorder %s222, 19
      %s224 = scalar_select %p223, %s222, 19
      %s225 = smul.addr %s224, 8
      %s226 = scalar_lea.vmem %s5, %s225
      %s227 = smul.u32 10, %s16
      %v228 = vld [vmem:[%s220] sm:$0xff]
      %v229 = vld [vmem:[%s220 + $0x8] sm:$0xff]
      %v230 = vld [vmem:[%s220 + $0x10] sm:$0xff]
      %v231 = vld [vmem:[%s220 + $0x18] sm:$0xff]
      %v232 = vld [vmem:[%s220 + $0x20] sm:$0xff]
      %v233 = vld [vmem:[%s220 + $0x28] sm:$0xff]
      %v234 = vld [vmem:[%s220 + $0x30] sm:$0xff]
      %v235 = vld [vmem:[%s220 + $0x38] sm:$0xff]
      %v236 = vld [vmem:[%s220 + $0x40] sm:$0xff]
      %v237 = vld [vmem:[%s220 + $0x48] sm:$0xff]
      %v238 = vld [vmem:[%s1] sm:$0xff]
      %v239 = vld [vmem:[%s1 + $0x8] sm:$0xff]
      %v240 = vld [vmem:[%s1 + $0x10] sm:$0xff]
      %v241 = vld [vmem:[%s1 + $0x18] sm:$0xff]
      %v242 = vld [vmem:[%s1 + $0x20] sm:$0xff]
      %v243 = vld [vmem:[%s1 + $0x28] sm:$0xff]
      %v244 = vld [vmem:[%s1 + $0x30] sm:$0xff]
      %v245 = vld [vmem:[%s1 + $0x38] sm:$0xff]
      %v246 = vld [vmem:[%s2] sm:$0x1]
      %v248 = vlaneseq
      %v249 = vshrl.u32 %v248, 7
      %v250 = vsub.s32 0, %v249
      %v251 = vrot.slane %v246, %v250
      %vm253 = vcmask 523264
      %v255 = vsel %vm253, %v228, 0
      %v258 = vsel %vm253, %v229, 0
      %v261 = vsel %vm253, %v230, 0
      %v264 = vsel %vm253, %v231, 0
      %v267 = vsel %vm253, %v232, 0
      %v270 = vsel %vm253, %v233, 0
      %v273 = vsel %vm253, %v234, 0
      %v276 = vsel %vm253, %v235, 0
      %v279 = vsel %vm253, %v236, 0
      %v282 = vsel %vm253, %v237, 0
      %284 = vmatprep.subr.mxu0 0.0
      %285 = vmatpush1.msra.mxu0 %v238
      %286 = vmatprep.subr.mxu0 0.0
      %287 = vmatpush1.msra.mxu0 %v239
      %288 = vmatprep.subr.mxu0 0.0
      %289 = vmatpush1.msra.mxu0 %v240
      %290 = vmatprep.subr.mxu0 0.0
      %291 = vmatpush1.msra.mxu0 %v241
      %292 = vmatprep.subr.mxu0 0.0
      %293 = vmatpush1.msra.mxu0 %v242
      %294 = vmatprep.subr.mxu0 0.0
      %295 = vmatpush1.msra.mxu0 %v243
      %296 = vmatprep.subr.mxu0 0.0
      %297 = vmatpush1.msra.mxu0 %v244
      %298 = vmatprep.subr.mxu0 0.0
      %299 = vmatpush1.msra.mxu0 %v245
      %300 = vmatprep.subr.mxu0 0.0
      %301 = vmatpush1.msra.mxu0 0.0
      %302 = vmatprep.subr.mxu0 0.0
      %303 = vmatpush1.msra.mxu0 0.0
      %304 = vmatprep.subr.mxu0 0.0
      %305 = vmatpush1.msra.mxu0 0.0
      %306 = vmatprep.subr.mxu0 0.0
      %307 = vmatpush1.msra.mxu0 0.0
      %308 = vmatprep.subr.mxu0 0.0
      %309 = vmatpush1.msra.mxu0 0.0
      %310 = vmatprep.subr.mxu0 0.0
      %311 = vmatpush1.msra.mxu0 0.0
      %312 = vmatprep.subr.mxu0 0.0
      %313 = vmatpush1.msra.mxu0 0.0
      %314 = vmatprep.subr.mxu0 0.0
      %315 = vmatpush1.msra.mxu0 0.0
      %316 = vmatprep.subr.mxu0 0.0
      %317 = vmatpush1.msra.mxu0 0.0
      %318 = vmatprep.subr.mxu0 0.0
      %319 = vmatpush1.msra.mxu0 0.0
      %320 = vmatprep.subr.mxu0 0.0
      %321 = vmatpush1.msra.mxu0 0.0
      %322 = vmatprep.subr.mxu0 0.0
      %323 = vmatpush1.msra.mxu0 0.0
      %324 = vmatprep.subr.mxu0 0.0
      %325 = vmatpush1.msra.mxu0 0.0
      %326 = vmatprep.subr.mxu0 0.0
      %327 = vmatpush1.msra.mxu0 0.0
      %328 = vmatprep.subr.mxu0 0.0
      %329 = vmatpush1.msra.mxu0 0.0
      %330 = vmatprep.subr.mxu0 0.0
      %331 = vmatpush1.msra.mxu0 0.0
      %332 = vmatprep.subr.mxu0 0.0
      %333 = vmatpush1.msra.mxu0 0.0
      %334 = vmatprep.subr.mxu0 0.0
      %335 = vmatpush1.msra.mxu0 0.0
      %336 = vmatprep.subr.mxu0 0.0
      %337 = vmatpush1.msra.mxu0 0.0
      %338 = vmatprep.subr.mxu0 0.0
      %339 = vmatpush1.msra.mxu0 0.0
      %340 = vmatprep.subr.mxu0 0.0
      %341 = vmatpush1.msra.mxu0 0.0
      %342 = vmatprep.subr.mxu0 0.0
      %343 = vmatpush1.msra.mxu0 0.0
      %344 = vmatprep.subr.mxu0 0.0
      %345 = vmatpush1.msra.mxu0 0.0
      %346 = vmatprep.subr.mxu0 0.0
      %347 = vmatpush1.msra.mxu0 0.0
      %348 = vmatprep.mubr.f32.mxu0 0.0
      %349 = vmatmul.mubr.f32.gmra.mrb[0].mxu0 %v255
      %v350 = vpop.f32.mrb[0].mxu0
      %v351 = vadd.f32 %v251, %v350
      %v352 = vpop.f32.mrb[0].mxu0
      %353 = vmatprep.mubr.f32.mxu0 0.0
      %354 = vmatmul.mubr.f32.gmra.mrb[0].mxu0 %v258
      %v355 = vpop.f32.mrb[0].mxu0
      %v356 = vadd.f32 %v251, %v355
      %v357 = vpop.f32.mrb[0].mxu0
      %358 = vmatprep.mubr.f32.mxu0 0.0
      %359 = vmatmul.mubr.f32.gmra.mrb[0].mxu0 %v261
      %v360 = vpop.f32.mrb[0].mxu0
      %v361 = vadd.f32 %v251, %v360
      %v362 = vpop.f32.mrb[0].mxu0
      %363 = vmatprep.mubr.f32.mxu0 0.0
      %364 = vmatmul.mubr.f32.gmra.mrb[0].mxu0 %v264
      %v365 = vpop.f32.mrb[0].mxu0
      %v366 = vadd.f32 %v251, %v365
      %v367 = vpop.f32.mrb[0].mxu0
      %368 = vmatprep.mubr.f32.mxu0 0.0
      %369 = vmatmul.mubr.f32.gmra.mrb[0].mxu0 %v267
      %v370 = vpop.f32.mrb[0].mxu0
      %v371 = vadd.f32 %v251, %v370
      %v372 = vpop.f32.mrb[0].mxu0
      %373 = vmatprep.mubr.f32.mxu0 0.0
      %374 = vmatmul.mubr.f32.gmra.mrb[0].mxu0 %v270
      %v375 = vpop.f32.mrb[0].mxu0
      %v376 = vadd.f32 %v251, %v375
      %v377 = vpop.f32.mrb[0].mxu0
      %378 = vmatprep.mubr.f32.mxu0 0.0
      %379 = vmatmul.mubr.f32.gmra.mrb[0].mxu0 %v273
      %v380 = vpop.f32.mrb[0].mxu0
      %v381 = vadd.f32 %v251, %v380
      %v382 = vpop.f32.mrb[0].mxu0
      %383 = vmatprep.mubr.f32.mxu0 0.0
      %384 = vmatmul.mubr.f32.gmra.mrb[0].mxu0 %v276
      %v385 = vpop.f32.mrb[0].mxu0
      %v386 = vadd.f32 %v251, %v385
      %v387 = vpop.f32.mrb[0].mxu0
      %388 = vmatprep.mubr.f32.mxu0 0.0
      %389 = vmatmul.mubr.f32.gmra.mrb[0].mxu0 %v279
      %v390 = vpop.f32.mrb[0].mxu0
      %v391 = vadd.f32 %v251, %v390
      %v392 = vpop.f32.mrb[0].mxu0
      %393 = vmatprep.mubr.f32.mxu0 0.0
      %394 = vmatmul.mubr.f32.gmra.mrb[0].mxu0 %v282
      %v395 = vpop.f32.mrb[0].mxu0
      %v396 = vadd.f32 %v251, %v395
      %v397 = vpop.f32.mrb[0].mxu0
      %398 = vdwg.mxu0
      %v399 = vmax.f32 %v351, 0.0
      %v400 = vmax.f32 %v356, 0.0
      %v401 = vmax.f32 %v361, 0.0
      %v402 = vmax.f32 %v366, 0.0
      %v403 = vmax.f32 %v371, 0.0
      %v404 = vmax.f32 %v376, 0.0
      %v405 = vmax.f32 %v381, 0.0
      %v406 = vmax.f32 %v386, 0.0
      %v407 = vmax.f32 %v391, 0.0
      %v408 = vmax.f32 %v396, 0.0
      %v409 = vld [vmem:[%s3] sm:$0xff]
      %v410 = vld [vmem:[%s3 + $0x8] sm:$0xff]
      %v411 = vld [vmem:[%s3 + $0x10] sm:$0xff]
      %v412 = vld [vmem:[%s3 + $0x18] sm:$0xff]
      %v413 = vld [vmem:[%s3 + $0x20] sm:$0xff]
      %v414 = vld [vmem:[%s3 + $0x28] sm:$0xff]
      %v415 = vld [vmem:[%s3 + $0x30] sm:$0xff]
      %v416 = vld [vmem:[%s3 + $0x38] sm:$0xff]
      %v417 = vld [vmem:[%s3 + $0x40] sm:$0xff]
      %v418 = vld [vmem:[%s3 + $0x48] sm:$0xff]
      %v419 = vld [vmem:[%s3 + $0x50] sm:$0xff]
      %v420 = vld [vmem:[%s3 + $0x58] sm:$0xff]
      %v421 = vld [vmem:[%s4] sm:$0x1]
      %v423 = vlaneseq
      %v424 = vshrl.u32 %v423, 7
      %v425 = vsub.s32 0, %v424
      %v426 = vrot.slane %v421, %v425
      %vm428 = vcmask 785408
      %v430 = vsel %vm428, %v399, 0
      %v433 = vsel %vm428, %v400, 0
      %v436 = vsel %vm428, %v401, 0
      %v439 = vsel %vm428, %v402, 0
      %v442 = vsel %vm428, %v403, 0
      %v445 = vsel %vm428, %v404, 0
      %v448 = vsel %vm428, %v405, 0
      %v451 = vsel %vm428, %v406, 0
      %v454 = vsel %vm428, %v407, 0
      %v457 = vsel %vm428, %v408, 0
      %459 = vmatprep.subr.mxu0 0.0
      %460 = vmatpush1.msra.mxu0 %v409
      %461 = vmatprep.subr.mxu0 0.0
      %462 = vmatpush1.msra.mxu0 %v410
      %463 = vmatprep.subr.mxu0 0.0
      %464 = vmatpush1.msra.mxu0 %v411
      %465 = vmatprep.subr.mxu0 0.0
      %466 = vmatpush1.msra.mxu0 %v412
      %467 = vmatprep.subr.mxu0 0.0
      %468 = vmatpush1.msra.mxu0 %v413
      %469 = vmatprep.subr.mxu0 0.0
      %470 = vmatpush1.msra.mxu0 %v414
      %471 = vmatprep.subr.mxu0 0.0
      %472 = vmatpush1.msra.mxu0 %v415
      %473 = vmatprep.subr.mxu0 0.0
      %474 = vmatpush1.msra.mxu0 %v416
      %475 = vmatprep.subr.mxu0 0.0
      %476 = vmatpush1.msra.mxu0 %v417
      %477 = vmatprep.subr.mxu0 0.0
      %478 = vmatpush1.msra.mxu0 %v418
      %479 = vmatprep.subr.mxu0 0.0
      %480 = vmatpush1.msra.mxu0 %v419
      %481 = vmatprep.subr.mxu0 0.0
      %482 = vmatpush1.msra.mxu0 %v420
      %483 = vmatprep.subr.mxu0 0.0
      %484 = vmatpush1.msra.mxu0 0.0
      %485 = vmatprep.subr.mxu0 0.0
      %486 = vmatpush1.msra.mxu0 0.0
      %487 = vmatprep.subr.mxu0 0.0
      %488 = vmatpush1.msra.mxu0 0.0
      %489 = vmatprep.subr.mxu0 0.0
      %490 = vmatpush1.msra.mxu0 0.0
      %491 = vmatprep.subr.mxu0 0.0
      %492 = vmatpush1.msra.mxu0 0.0
      %493 = vmatprep.subr.mxu0 0.0
      %494 = vmatpush1.msra.mxu0 0.0
      %495 = vmatprep.subr.mxu0 0.0
      %496 = vmatpush1.msra.mxu0 0.0
      %497 = vmatprep.subr.mxu0 0.0
      %498 = vmatpush1.msra.mxu0 0.0
      %499 = vmatprep.subr.mxu0 0.0
      %500 = vmatpush1.msra.mxu0 0.0
      %501 = vmatprep.subr.mxu0 0.0
      %502 = vmatpush1.msra.mxu0 0.0
      %503 = vmatprep.subr.mxu0 0.0
      %504 = vmatpush1.msra.mxu0 0.0
      %505 = vmatprep.subr.mxu0 0.0
      %506 = vmatpush1.msra.mxu0 0.0
      %507 = vmatprep.subr.mxu0 0.0
      %508 = vmatpush1.msra.mxu0 0.0
      %509 = vmatprep.subr.mxu0 0.0
      %510 = vmatpush1.msra.mxu0 0.0
      %511 = vmatprep.subr.mxu0 0.0
      %512 = vmatpush1.msra.mxu0 0.0
      %513 = vmatprep.subr.mxu0 0.0
      %514 = vmatpush1.msra.mxu0 0.0
      %515 = vmatprep.subr.mxu0 0.0
      %516 = vmatpush1.msra.mxu0 0.0
      %517 = vmatprep.subr.mxu0 0.0
      %518 = vmatpush1.msra.mxu0 0.0
      %519 = vmatprep.subr.mxu0 0.0
      %520 = vmatpush1.msra.mxu0 0.0
      %521 = vmatprep.subr.mxu0 0.0
      %522 = vmatpush1.msra.mxu0 0.0
      %523 = vmatprep.mubr.f32.mxu0 0.0
      %524 = vmatmul.mubr.f32.gmra.mrb[0].mxu0 %v430
      %v525 = vpop.f32.mrb[0].mxu0
      %v526 = vadd.f32 %v426, %v525
      %v527 = vpop.f32.mrb[0].mxu0
      %528 = vmatprep.mubr.f32.mxu0 0.0
      %529 = vmatmul.mubr.f32.gmra.mrb[0].mxu0 %v433
      %v530 = vpop.f32.mrb[0].mxu0
      %v531 = vadd.f32 %v426, %v530
      %v532 = vpop.f32.mrb[0].mxu0
      %533 = vmatprep.mubr.f32.mxu0 0.0
      %534 = vmatmul.mubr.f32.gmra.mrb[0].mxu0 %v436
      %v535 = vpop.f32.mrb[0].mxu0
      %v536 = vadd.f32 %v426, %v535
      %v537 = vpop.f32.mrb[0].mxu0
      %538 = vmatprep.mubr.f32.mxu0 0.0
      %539 = vmatmul.mubr.f32.gmra.mrb[0].mxu0 %v439
      %v540 = vpop.f32.mrb[0].mxu0
      %v541 = vadd.f32 %v426, %v540
      %v542 = vpop.f32.mrb[0].mxu0
      %543 = vmatprep.mubr.f32.mxu0 0.0
      %544 = vmatmul.mubr.f32.gmra.mrb[0].mxu0 %v442
      %v545 = vpop.f32.mrb[0].mxu0
      %v546 = vadd.f32 %v426, %v545
      %v547 = vpop.f32.mrb[0].mxu0
      %548 = vmatprep.mubr.f32.mxu0 0.0
      %549 = vmatmul.mubr.f32.gmra.mrb[0].mxu0 %v445
      %v550 = vpop.f32.mrb[0].mxu0
      %v551 = vadd.f32 %v426, %v550
      %v552 = vpop.f32.mrb[0].mxu0
      %553 = vmatprep.mubr.f32.mxu0 0.0
      %554 = vmatmul.mubr.f32.gmra.mrb[0].mxu0 %v448
      %v555 = vpop.f32.mrb[0].mxu0
      %v556 = vadd.f32 %v426, %v555
      %v557 = vpop.f32.mrb[0].mxu0
      %558 = vmatprep.mubr.f32.mxu0 0.0
      %559 = vmatmul.mubr.f32.gmra.mrb[0].mxu0 %v451
      %v560 = vpop.f32.mrb[0].mxu0
      %v561 = vadd.f32 %v426, %v560
      %v562 = vpop.f32.mrb[0].mxu0
      %563 = vmatprep.mubr.f32.mxu0 0.0
      %564 = vmatmul.mubr.f32.gmra.mrb[0].mxu0 %v454
      %v565 = vpop.f32.mrb[0].mxu0
      %v566 = vadd.f32 %v426, %v565
      %v567 = vpop.f32.mrb[0].mxu0
      %568 = vmatprep.mubr.f32.mxu0 0.0
      %569 = vmatmul.mubr.f32.gmra.mrb[0].mxu0 %v457
      %v570 = vpop.f32.mrb[0].mxu0
      %v571 = vadd.f32 %v426, %v570
      %v572 = vpop.f32.mrb[0].mxu0
      %573 = vdwg.mxu0
      %vm574 = vcmask 80896
      %575 = vst.msk [vmem:[%s226] sm:$0xff] %vm574, %v526
      %576 = vst.msk [vmem:[%s226 + $0x8] sm:$0xff] %vm574, %v531
      %577 = vst.msk [vmem:[%s226 + $0x10] sm:$0xff] %vm574, %v536
      %578 = vst.msk [vmem:[%s226 + $0x18] sm:$0xff] %vm574, %v541
      %579 = vst.msk [vmem:[%s226 + $0x20] sm:$0xff] %vm574, %v546
      %580 = vst.msk [vmem:[%s226 + $0x28] sm:$0xff] %vm574, %v551
      %581 = vst.msk [vmem:[%s226 + $0x30] sm:$0xff] %vm574, %v556
      %582 = vst.msk [vmem:[%s226 + $0x38] sm:$0xff] %vm574, %v561
      %583 = vst.msk [vmem:[%s226 + $0x40] sm:$0xff] %vm574, %v566
      %584 = vst.msk [vmem:[%s226 + $0x48] sm:$0xff] %vm574, %v571
      %s585 = smul.u32 10, %s16
      %p586 = scmp.lt.s32.totalorder %s585, 19
      %s587 = scalar_select %p586, %s585, 19
      %s588 = smul.addr %s587, 8
      %s589 = scalar_lea.vmem %s5, %s588
      // Predicated region
      $region41: #{tpu_custom_call.1} parent=39 // pred_check
        %p590 = pneg %p144
      $region42: #{tpu_custom_call.1} parent=39 // pred_check_branch
        %592 = sbr.rel (%p590) target = $region44
      $region43: #{tpu_custom_call.1} parent=39 // pred_region
        %s593 = smul.u32 10, %s16
      $region44: #{tpu_custom_call.1} parent=39 // pred_fallthru
        _
    $region40: #{tpu_custom_call.1} parent=5 // pred_fallthru
      _
    %p594 = scmp.le.s32.totalorder 2, %s11
    // Predicated region
    $region45: #{tpu_custom_call.1} parent=5 // pred_check
      %p595 = pneg %p594
    $region46: #{tpu_custom_call.1} parent=5 // pred_check_branch
      %597 = sbr.rel (%p595) target = $region48
    $region47: #{tpu_custom_call.1} parent=5 // pred_region
      %s598 = ssub.s32 %s11, 2
      // Predicated region
      $region49: #{tpu_custom_call.1} parent=47 // pred_check
        %p599 = pneg %p150
      $region50: #{tpu_custom_call.1} parent=47 // pred_check_branch
        %601 = sbr.rel (%p599) target = $region52
      $region51: #{tpu_custom_call.1} parent=47 // pred_region
        %s602 = smul.u32 10, %s17
        %p603 = scmp.lt.s32.totalorder %s602, 19
        %s604 = scalar_select %p603, %s602, 19
        %s605 = smul.addr %s604, 8
        %s606 = scalar_lea.vmem %s5, %s605
      $region52: #{tpu_custom_call.1} parent=47 // pred_fallthru
        _
    $region48: #{tpu_custom_call.1} parent=5 // pred_fallthru
      _
  $region6: #{tpu_custom_call.1} parent=0 // loop_footer
    %s15 = sadd.s32 1, %s11
  $region7: #{tpu_custom_call.1} parent=0 // loop_footer_branch
    %10 = sbr.rel target = $region3
  $region8: #{tpu_custom_call.1} parent=0 // loop_exit
    _

</llo_original>
